<compile_context>
chip_gen: v6e
topology: v6e:2x2x1
jax: 0.10.0
libtpu: 0.0.40
codegen_flags: <defaults>
</compile_context>

<pallas_src>
import jax
import jax.numpy as jnp
from jax.experimental import pallas as pl
from jax.experimental.pallas import tpu as pltpu


def _cdiv(a, b):
    return -(-a // b)


def _round_up(a, b):
    return _cdiv(a, b) * b


def _tpu_config():
    """Best-effort chip introspection; conservative defaults if unavailable."""
    vmem_bytes = 128 << 20
    is_v7x = False
    bf16_mxu = False
    kind = ""
    try:
        kind = jax.devices()[0].device_kind.lower()
    except Exception:
        pass
    try:
        info = pltpu.get_tpu_info()
        v = getattr(info, "vmem_capacity_bytes", None)
        if v:
            vmem_bytes = int(v)
    except Exception:
        pass
    if "v7" in kind or "7x" in kind:
        is_v7x = True
        bf16_mxu = True
        vmem_bytes = min(vmem_bytes, 64 << 20)
    elif "v6" in kind:
        bf16_mxu = True
        vmem_bytes = min(vmem_bytes, 128 << 20)
    # v5e / unknown: keep f32 weights, 128 MiB assumption (conservative).
    return {"vmem_bytes": vmem_bytes, "is_v7x": is_v7x, "bf16_mxu": bf16_mxu,
            "kind": kind}


def pidnode_kernel(params_ref, x_ref, w_ref, b_ref, out_ref):
    # Folded scalar parameters from SMEM:
    #   c_h = kp + softplus(corr), c_m = sigmoid(gamma) + kd, c_i = ki
    c_h = params_ref[0]
    c_m = params_ref[1]
    c_i = params_ref[2]

    d = w_ref.shape[0]  # static, lane-aligned feature dim

    # Channel split fused into the kernel: static, 128-lane-aligned slices of
    # the (tile_b, 3*D) block -> plain whole-vreg loads, no relayout.
    h = x_ref[:, :d]
    m = x_ref[:, d:2 * d]
    v = x_ref[:, 2 * d:]

    # df(t, h) = h @ W + b  (MXU matmul; bf16 operands when W is bf16, f32 acc).
    df = jnp.dot(h.astype(w_ref.dtype), w_ref[...],
                 preferred_element_type=jnp.float32) + b_ref[...]

    # Channel concat fused into the kernel: three lane-aligned, full-width,
    # unmasked stores into the single (tile_b, 3*D) output block.
    out_ref[:, :d] = m                                        # dh
    out_ref[:, d:2 * d] = df - c_h * h - c_m * m - c_i * v    # dm
    out_ref[:, 2 * d:] = h                                    # dv


def pidnode_forward(x, t, W, b, kp, ki, kd, gamma, corr, *,
                    tile_b=1024, w_dtype=None, data_buffers=None):
    """x: (B, 3, D) float32. Returns (B, 3, D) float32."""
    del t  # the synthetic Linear df ignores t
    B, three, D = x.shape
    assert three == 3

    cfg = _tpu_config()
    if w_dtype is None:
        # bf16 W on bf16-native MXU chips (v6e / v7x); f32 elsewhere.
        w_dtype = jnp.bfloat16 if cfg["bf16_mxu"] else jnp.float32
    if data_buffers is None:
        # Sweepable; 3rd buffer is cheap and helps on v7x where per-step DMAs
        # are very short.
        data_buffers = 3 if cfg["is_v7x"] else 2

    # ---- Padding / tiling ---------------------------------------------------
    D_pad = _round_up(max(D, 1), 128)     # lane alignment
    B8 = _round_up(max(B, 1), 8)          # sublane alignment

    usable_vmem = int(cfg["vmem_bytes"] * 0.75)   # ~96 MiB v5e/v6e, ~48 MiB v7x
    w_itemsize = jnp.dtype(w_dtype).itemsize
    w_bytes = D_pad * D_pad * w_itemsize          # single-buffered (resident)
    b_bytes = D_pad * 4
    resident = w_bytes + b_bytes
    out_buffers = 2
    per_row = (data_buffers + out_buffers) * 3 * D_pad * 4  # in+out bytes / batch row
    tile_cap = max(8, (((usable_vmem - resident) // per_row) // 8) * 8)

    tb = max(8, min(_round_up(int(tile_b), 8), tile_cap, B8))
    nsteps = _cdiv(B8, tb)

    # v7x only: keep an even grid so the two TensorCores split the batch axis.
    if cfg["is_v7x"] and B8 >= 16 and (nsteps % 2 == 1):
        nsteps = 2 if nsteps == 1 else nsteps + 1

    # Rebalance the tile to minimize zero-padding for the chosen step count.
    tb = max(8, _round_up(_cdiv(B8, nsteps), 8))
    B_pad = nsteps * tb

    # ---- Host-side data prep (free reshape; pad only when misaligned) -------
    xp = x.astype(jnp.float32)
    if (B_pad != B) or (D_pad != D):
        xp = jnp.pad(xp, ((0, B_pad - B), (0, 0), (0, D_pad - D)))
    x2 = xp.reshape(B_pad, 3 * D_pad)

    Wp = W.astype(jnp.float32)
    bp = b.astype(jnp.float32)
    if D_pad != D:
        Wp = jnp.pad(Wp, ((0, D_pad - D), (0, D_pad - D)))
        bp = jnp.pad(bp, ((0, D_pad - D),))
    Wp = Wp.astype(w_dtype)
    b2d = bp.reshape(1, D_pad)

    # Scalar parameter transforms + algebraic fold (gammaact=sigmoid, sp=Softplus).
    alpha = jax.nn.sigmoid(jnp.float32(gamma))
    sp_corr = jax.nn.softplus(jnp.float32(corr))
    params = jnp.stack([
        jnp.float32(kp) + sp_corr,   # c_h
        alpha + jnp.float32(kd),     # c_m
        jnp.float32(ki),             # c_i
    ]).astype(jnp.float32)

    # ---- VMEM limit from actual tile footprint -------------------------------
    need = resident + (data_buffers + out_buffers) * tb * 3 * D_pad * 4
    vmem_limit = min(usable_vmem, need + (4 << 20))
    vmem_limit = int(max(vmem_limit, need + (1 << 20)))

    cost = pl.CostEstimate(
        flops=2 * B_pad * D_pad * D_pad + 8 * B_pad * D_pad,
        transcendentals=0,
        bytes_accessed=2 * 4 * 3 * B_pad * D_pad + w_bytes + b_bytes,
    )

    def run(use_pipeline_hints):
        def data_in_spec():
            if use_pipeline_hints and data_buffers != 2:
                return pl.BlockSpec((tb, 3 * D_pad), lambda i: (i, 0),
                                    pipeline_mode=pl.Buffered(data_buffers))
            return pl.BlockSpec((tb, 3 * D_pad), lambda i: (i, 0))

        def const_spec(shape):
            # Constant index_map -> resident across grid steps; single buffer.
            if use_pipeline_hints:
                return pl.BlockSpec(shape, lambda i: (0, 0),
                                    pipeline_mode=pl.Buffered(1))
            return pl.BlockSpec(shape, lambda i: (0, 0))

        return pl.pallas_call(
            pidnode_kernel,
            out_shape=jax.ShapeDtypeStruct((B_pad, 3 * D_pad), jnp.float32),
            grid_spec=pltpu.PrefetchScalarGridSpec(
                num_scalar_prefetch=0,
                grid=(nsteps,),
                in_specs=[
                    pl.BlockSpec(memory_space=pltpu.MemorySpace.SMEM),  # params (3,)
                    data_in_spec(),                                     # x (B_pad, 3*D_pad)
                    const_spec((D_pad, D_pad)),                         # W (resident)
                    const_spec((1, D_pad)),                             # b (resident)
                ],
                out_specs=pl.BlockSpec((tb, 3 * D_pad), lambda i: (i, 0)),
            ),
            compiler_params=pltpu.CompilerParams(
                dimension_semantics=("parallel",),
                vmem_limit_bytes=vmem_limit,
            ),
            cost_estimate=cost,
        )(params, x2, Wp, b2d)

    try:
        out2 = run(True)
    except Exception:
        # Fallback for Pallas builds without pipeline_mode / Buffered(1) support.
        out2 = run(False)

    # Free trailing-dim split back to the module's (B, 3, D) layout (+ unpad).
    return out2.reshape(B_pad, 3, D_pad)[:B, :, :D]


def pidnode_reference(x, W, b, kp, ki, kd, gamma, corr):
    # Pure-JAX reference in the module's (unfused, f32) operation order.
    h = x[:, 0, :]
    m = x[:, 1, :]
    v = x[:, 2, :]
    alpha = jax.nn.sigmoid(jnp.float32(gamma))
    sp_corr = jax.nn.softplus(jnp.float32(corr))
    df = h @ W + b[None, :]
    dh = m
    dm = -kp * h - (alpha + kd) * m - ki * v + df - sp_corr * h
    dv = h
    return jnp.stack([dh, dm, dv], axis=1)


if __name__ == "__main__":
    key = jax.random.PRNGKey(0)
    k_x, k_w, k_b = jax.random.split(key, 3)

    # PIDNODE defaults: kp=1, ki=1, kd=2, gamma_guess=-3, corr=-100 (frozen), gt=6.
    kp, ki, kd, gamma, corr = 1.0, 1.0, 2.0, -3.0, -100.0
    t = jnp.array([0.1], dtype=jnp.float32)

    cfg = _tpu_config()
    w_dtype = jnp.bfloat16 if cfg["bf16_mxu"] else jnp.float32
    tol = 1e-4 if w_dtype == jnp.float32 else 2e-2  # bf16-W path needs looser tol

    # Small shapes consistent with the module: x is (batch, 3, dim).
    # This case exercises the padding path (B -> 8, D -> 128 internally).
    B, D = 8, 32
    x = jax.random.normal(k_x, (B, 3, D), dtype=jnp.float32)
    W = jax.random.normal(k_w, (D, D), dtype=jnp.float32) / jnp.sqrt(D)
    b = jax.random.normal(k_b, (D,), dtype=jnp.float32) * 0.01

    out = pidnode_forward(x, t, W, b, kp, ki, kd, gamma, corr, w_dtype=w_dtype)
    out = jax.block_until_ready(out)
    ref = pidnode_reference(x, W, b, kp, ki, kd, gamma, corr)
    assert out.shape == (B, 3, D)
    assert jnp.allclose(out, ref, atol=tol, rtol=tol), "mismatch (padded path)"

    # Second small check on a lane/sublane-aligned shape (no-padding fast path).
    B2, D2 = 16, 128
    x2 = jax.random.normal(k_x, (B2, 3, D2), dtype=jnp.float32)
    W2 = jax.random.normal(k_w, (D2, D2), dtype=jnp.float32) / jnp.sqrt(D2)
    b2 = jax.random.normal(k_b, (D2,), dtype=jnp.float32) * 0.01

    out2 = pidnode_forward(x2, t, W2, b2, kp, ki, kd, gamma, corr, w_dtype=w_dtype)
    out2 = jax.block_until_ready(out2)
    ref2 = pidnode_reference(x2, W2, b2, kp, ki, kd, gamma, corr)
    assert out2.shape == (B2, 3, D2)
    assert jnp.allclose(out2, ref2, atol=tol, rtol=tol), "mismatch (aligned path)"

    print("KERNEL_OK")
</pallas_src>

<mosaic_0001>
module attributes {stable_mosaic.version = 11 : i64} {
  func.func @pidnode_kernel(%arg0: i32, %arg1: memref<3xf32, #tpu.memory_space<smem>>, %arg2: memref<8x384xf32, #tpu.memory_space<vmem>>, %arg3: memref<128x128xf32, #tpu.memory_space<vmem>>, %arg4: memref<1x128xf32, #tpu.memory_space<vmem>>, %arg5: memref<8x384xf32, #tpu.memory_space<vmem>>) attributes {dimension_semantics = [#tpu.dimension_semantics<parallel>], iteration_bounds = array<i64: 1>, scalar_prefetch = 0 : i64, scratch_operands = 0 : i64, tpu.core_type = #tpu.core_type<tc>, window_params = [{transform_indices = @transform_0, window_bounds = array<i64: 3>}, {transform_indices = @transform_1, window_bounds = array<i64: 8, 384>}, {pipeline_mode = #tpu.pipeline_mode<synchronous>, transform_indices = @transform_2, window_bounds = array<i64: 128, 128>}, {pipeline_mode = #tpu.pipeline_mode<synchronous>, transform_indices = @transform_3, window_bounds = array<i64: 1, 128>}, {transform_indices = @transform_4, window_bounds = array<i64: 8, 384>}]} {
    %c0 = arith.constant 0 : index
    %0 = memref.load %arg1[%c0] : memref<3xf32, #tpu.memory_space<smem>>
    %c1 = arith.constant 1 : index
    %1 = memref.load %arg1[%c1] : memref<3xf32, #tpu.memory_space<smem>>
    %c2 = arith.constant 2 : index
    %2 = memref.load %arg1[%c2] : memref<3xf32, #tpu.memory_space<smem>>
    %c0_0 = arith.constant 0 : index
    %c0_1 = arith.constant 0 : index
    %3 = vector.load %arg2[%c0_0, %c0_1] : memref<8x384xf32, #tpu.memory_space<vmem>>, vector<8x128xf32>
    %c0_2 = arith.constant 0 : index
    %c128 = arith.constant 128 : index
    %4 = vector.load %arg2[%c0_2, %c128] : memref<8x384xf32, #tpu.memory_space<vmem>>, vector<8x128xf32>
    %c0_3 = arith.constant 0 : index
    %c256 = arith.constant 256 : index
    %5 = vector.load %arg2[%c0_3, %c256] : memref<8x384xf32, #tpu.memory_space<vmem>>, vector<8x128xf32>
    %c0_4 = arith.constant 0 : index
    %c0_5 = arith.constant 0 : index
    %6 = vector.load %arg3[%c0_4, %c0_5] : memref<128x128xf32, #tpu.memory_space<vmem>>, vector<128x128xf32>
    %cst = arith.constant dense<0.000000e+00> : vector<8x128xf32>
    %7 = tpu.matmul %3, %6, %cst {dimension_numbers = #tpu.dot_dimension_numbers<[1], [0], [0], [1], [0, 0, 1, 1], [], []>} : vector<8x128xf32>, vector<128x128xf32>, vector<8x128xf32> -> vector<8x128xf32>
    %c0_6 = arith.constant 0 : index
    %c0_7 = arith.constant 0 : index
    %8 = vector.load %arg4[%c0_6, %c0_7] : memref<1x128xf32, #tpu.memory_space<vmem>>, vector<1x128xf32>
    %9 = vector.broadcast %8 : vector<1x128xf32> to vector<8x128xf32>
    %10 = arith.addf %7, %9 : vector<8x128xf32>
    %c0_8 = arith.constant 0 : index
    %c0_9 = arith.constant 0 : index
    %11 = vector.load %arg5[%c0_8, %c0_9] : memref<8x384xf32, #tpu.memory_space<vmem>>, vector<8x128xf32>
    tpu.vector_store %arg5[%c0_8, %c0_9], %4 {strides = array<i32>} : memref<8x384xf32, #tpu.memory_space<vmem>>, vector<8x128xf32>,
    %12 = vector.broadcast %0 : f32 to vector<8x128xf32>
    %13 = arith.mulf %12, %3 : vector<8x128xf32>
    %14 = arith.subf %10, %13 : vector<8x128xf32>
    %15 = vector.broadcast %1 : f32 to vector<8x128xf32>
    %16 = arith.mulf %15, %4 : vector<8x128xf32>
    %17 = arith.subf %14, %16 : vector<8x128xf32>
    %18 = vector.broadcast %2 : f32 to vector<8x128xf32>
    %19 = arith.mulf %18, %5 : vector<8x128xf32>
    %20 = arith.subf %17, %19 : vector<8x128xf32>
    %c0_10 = arith.constant 0 : index
    %c128_11 = arith.constant 128 : index
    %21 = vector.load %arg5[%c0_10, %c128_11] : memref<8x384xf32, #tpu.memory_space<vmem>>, vector<8x128xf32>
    tpu.vector_store %arg5[%c0_10, %c128_11], %20 {strides = array<i32>} : memref<8x384xf32, #tpu.memory_space<vmem>>, vector<8x128xf32>,
    %c0_12 = arith.constant 0 : index
    %c256_13 = arith.constant 256 : index
    %22 = vector.load %arg5[%c0_12, %c256_13] : memref<8x384xf32, #tpu.memory_space<vmem>>, vector<8x128xf32>
    tpu.vector_store %arg5[%c0_12, %c256_13], %3 {strides = array<i32>} : memref<8x384xf32, #tpu.memory_space<vmem>>, vector<8x128xf32>,
    return
  }
  func.func @transform_0(%arg0: i32) -> i32 {
    %c0_i32 = arith.constant 0 : i32
    %c0_i32_0 = arith.constant 0 : i32
    return %c0_i32 : i32
  }
  func.func @transform_1(%arg0: i32) -> (i32, i32) {
    %c0_i32 = arith.constant 0 : i32
    %c0_i32_0 = arith.constant 0 : i32
    return %arg0, %c0_i32 : i32, i32
  }
  func.func @transform_2(%arg0: i32) -> (i32, i32) {
    %c0_i32 = arith.constant 0 : i32
    %c0_i32_0 = arith.constant 0 : i32
    %c0_i32_1 = arith.constant 0 : i32
    return %c0_i32, %c0_i32_0 : i32, i32
  }
  func.func @transform_3(%arg0: i32) -> (i32, i32) {
    %c0_i32 = arith.constant 0 : i32
    %c0_i32_0 = arith.constant 0 : i32
    %c0_i32_1 = arith.constant 0 : i32
    return %c0_i32, %c0_i32_0 : i32, i32
  }
  func.func @transform_4(%arg0: i32) -> (i32, i32) {
    %c0_i32 = arith.constant 0 : i32
    %c0_i32_0 = arith.constant 0 : i32
    return %arg0, %c0_i32 : i32, i32
  }
}

module attributes {stable_mosaic.version = 11 : i64} {
  func.func @pidnode_kernel(%arg0: i32, %arg1: memref<3xf32, #tpu.memory_space<smem>>, %arg2: memref<8x384xf32, #tpu.memory_space<vmem>>, %arg3: memref<128x128xf32, #tpu.memory_space<vmem>>, %arg4: memref<1x128xf32, #tpu.memory_space<vmem>>, %arg5: memref<8x384xf32, #tpu.memory_space<vmem>>) attributes {dimension_semantics = [#tpu.dimension_semantics<parallel>], iteration_bounds = array<i64: 1>, scalar_prefetch = 0 : i64, scratch_operands = 0 : i64, tpu.core_type = #tpu.core_type<tc>, window_params = [{transform_indices = @transform_0, window_bounds = array<i64: 3>}, {transform_indices = @transform_1, window_bounds = array<i64: 8, 384>}, {pipeline_mode = #tpu.pipeline_mode<synchronous>, transform_indices = @transform_2, window_bounds = array<i64: 128, 128>}, {pipeline_mode = #tpu.pipeline_mode<synchronous>, transform_indices = @transform_3, window_bounds = array<i64: 1, 128>}, {transform_indices = @transform_4, window_bounds = array<i64: 8, 384>}]} {
    %c0 = arith.constant 0 : index
    %0 = memref.load %arg1[%c0] : memref<3xf32, #tpu.memory_space<smem>>
    %c1 = arith.constant 1 : index
    %1 = memref.load %arg1[%c1] : memref<3xf32, #tpu.memory_space<smem>>
    %c2 = arith.constant 2 : index
    %2 = memref.load %arg1[%c2] : memref<3xf32, #tpu.memory_space<smem>>
    %c0_0 = arith.constant 0 : index
    %c0_1 = arith.constant 0 : index
    %3 = vector.load %arg2[%c0_0, %c0_1] : memref<8x384xf32, #tpu.memory_space<vmem>>, vector<8x128xf32>
    %c0_2 = arith.constant 0 : index
    %c128 = arith.constant 128 : index
    %4 = vector.load %arg2[%c0_2, %c128] : memref<8x384xf32, #tpu.memory_space<vmem>>, vector<8x128xf32>
    %c0_3 = arith.constant 0 : index
    %c256 = arith.constant 256 : index
    %5 = vector.load %arg2[%c0_3, %c256] : memref<8x384xf32, #tpu.memory_space<vmem>>, vector<8x128xf32>
    %c0_4 = arith.constant 0 : index
    %c0_5 = arith.constant 0 : index
    %6 = vector.load %arg3[%c0_4, %c0_5] : memref<128x128xf32, #tpu.memory_space<vmem>>, vector<128x128xf32>
    %cst = arith.constant dense<0.000000e+00> : vector<8x128xf32>
    %7 = tpu.matmul %3, %6, %cst {dimension_numbers = #tpu.dot_dimension_numbers<[1], [0], [0], [1], [0, 0, 1, 1], [], []>} : vector<8x128xf32>, vector<128x128xf32>, vector<8x128xf32> -> vector<8x128xf32>
    %c0_6 = arith.constant 0 : index
    %c0_7 = arith.constant 0 : index
    %8 = vector.load %arg4[%c0_6, %c0_7] : memref<1x128xf32, #tpu.memory_space<vmem>>, vector<1x128xf32>
    %9 = vector.broadcast %8 : vector<1x128xf32> to vector<8x128xf32>
    %10 = arith.addf %7, %9 : vector<8x128xf32>
    %c0_8 = arith.constant 0 : index
    %c0_9 = arith.constant 0 : index
    %11 = vector.load %arg5[%c0_8, %c0_9] : memref<8x384xf32, #tpu.memory_space<vmem>>, vector<8x128xf32>
    tpu.vector_store %arg5[%c0_8, %c0_9], %4 {strides = array<i32>} : memref<8x384xf32, #tpu.memory_space<vmem>>, vector<8x128xf32>,
    %12 = vector.broadcast %0 : f32 to vector<8x128xf32>
    %13 = arith.mulf %12, %3 : vector<8x128xf32>
    %14 = arith.subf %10, %13 : vector<8x128xf32>
    %15 = vector.broadcast %1 : f32 to vector<8x128xf32>
    %16 = arith.mulf %15, %4 : vector<8x128xf32>
    %17 = arith.subf %14, %16 : vector<8x128xf32>
    %18 = vector.broadcast %2 : f32 to vector<8x128xf32>
    %19 = arith.mulf %18, %5 : vector<8x128xf32>
    %20 = arith.subf %17, %19 : vector<8x128xf32>
    %c0_10 = arith.constant 0 : index
    %c128_11 = arith.constant 128 : index
    %21 = vector.load %arg5[%c0_10, %c128_11] : memref<8x384xf32, #tpu.memory_space<vmem>>, vector<8x128xf32>
    tpu.vector_store %arg5[%c0_10, %c128_11], %20 {strides = array<i32>} : memref<8x384xf32, #tpu.memory_space<vmem>>, vector<8x128xf32>,
    %c0_12 = arith.constant 0 : index
    %c256_13 = arith.constant 256 : index
    %22 = vector.load %arg5[%c0_12, %c256_13] : memref<8x384xf32, #tpu.memory_space<vmem>>, vector<8x128xf32>
    tpu.vector_store %arg5[%c0_12, %c256_13], %3 {strides = array<i32>} : memref<8x384xf32, #tpu.memory_space<vmem>>, vector<8x128xf32>,
    return
  }
  func.func @transform_0(%arg0: i32) -> i32 {
    %c0_i32 = arith.constant 0 : i32
    %c0_i32_0 = arith.constant 0 : i32
    return %c0_i32 : i32
  }
  func.func @transform_1(%arg0: i32) -> (i32, i32) {
    %c0_i32 = arith.constant 0 : i32
    %c0_i32_0 = arith.constant 0 : i32
    return %arg0, %c0_i32 : i32, i32
  }
  func.func @transform_2(%arg0: i32) -> (i32, i32) {
    %c0_i32 = arith.constant 0 : i32
    %c0_i32_0 = arith.constant 0 : i32
    %c0_i32_1 = arith.constant 0 : i32
    return %c0_i32, %c0_i32_0 : i32, i32
  }
  func.func @transform_3(%arg0: i32) -> (i32, i32) {
    %c0_i32 = arith.constant 0 : i32
    %c0_i32_0 = arith.constant 0 : i32
    %c0_i32_1 = arith.constant 0 : i32
    return %c0_i32, %c0_i32_0 : i32, i32
  }
  func.func @transform_4(%arg0: i32) -> (i32, i32) {
    %c0_i32 = arith.constant 0 : i32
    %c0_i32_0 = arith.constant 0 : i32
    return %arg0, %c0_i32 : i32, i32
  }
}

</mosaic_0001>

<llo_original>
// kernel: tpu_custom_call.1
$region0: #{tpu_custom_call.1}
  #allocation0 [shape = 'u32[]', space=smem, size = 0x4, offset = 0x4, fixed_abs, tag = 'smem constant byte address 0x4 - core index']
  #allocation1 [shape = 'u32[144,128]{1,0:T(1,128)}', space=vmem, size = 0x12000, scoped, tag = 'internal scratch']
  %s0 = inlined_call_operand.hbm [shape: f32[3], index: 0, kind: input, shape index: {}]
  %s1 = inlined_call_operand.hbm [shape: f32[8,384], index: 1, kind: input, shape index: {}]
  %s2 = inlined_call_operand.hbm [shape: f32[128,128], index: 2, kind: input, shape index: {}]
  %s3 = inlined_call_operand.vmem [shape: f32[1,128], index: 3, kind: input, shape index: {}]
  %s4 = inlined_call_operand.hbm [shape: f32[8,384], index: 4, kind: output, shape index: {}]
  %s5 = sld [smem:[#allocation0]]
  $region38: #{tpu_custom_call.1} parent=0
    _
  %s7 = ssub.s32 1, %s5
  %s8 = scalar_select 0, %s7, %s5
  $region1: #{tpu_custom_call.1} parent=0
    #allocation2 [shape = 'u8[512]{0}', space=smem, size = 0x200, scoped, tag = 'input window, operand 0, single buffered']
    #allocation3 [shape = 's32[1]{0}', space=sflag, size = 0x4, scoped, tag = 'scoped memory for tpu_custom_call.1']
    #allocation4 [shape = 's32[1]{0}', space=sflag, size = 0x4, scoped, tag = 'scoped memory for tpu_custom_call.1']
    #allocation5 [shape = 's32[1]{0}', space=sflag, size = 0x4, scoped, tag = 'scoped memory for tpu_custom_call.1']
    #allocation6 [shape = 'u8[12288]{0}', space=vmem, size = 0x3000, scoped, tag = 'input window, operand 1, single buffered']
    #allocation7 [shape = 'u8[65536]{0}', space=vmem, size = 0x10000, scoped, tag = 'input window, operand 2, single buffered']
    #allocation8 [shape = 's32[1]{0}', space=sflag, size = 0x4, scoped, tag = 'scoped memory for tpu_custom_call.1']
    #allocation9 [shape = 'u8[12288]{0}', space=vmem, size = 0x3000, scoped, tag = 'output window, operand 0, single buffered']
    %9 = vsyncpa [#allocation5], 0
    %10 = vsyncpa [#allocation3], 0
    %11 = vsyncpa [#allocation8], 0
    %12 = vsyncpa [#allocation4], 0
    // Predicated region
    $region2: #{tpu_custom_call.1} parent=1 // pred_check
      _
    $region3: #{tpu_custom_call.1} parent=1 // pred_check_branch
      %14 = sbr.rel (0) target = $region5
    $region4: #{tpu_custom_call.1} parent=1 // pred_region
      %s16 = ssub.s32 16, 16
      %17 = vsyncadd [#allocation5], %s16
      %20 = dma.hbm_to_smem %s0, 16, [#allocation2], [#allocation5]
    $region5: #{tpu_custom_call.1} parent=1 // pred_fallthru
      _
    // Predicated region
    $region6: #{tpu_custom_call.1} parent=1 // pred_check
      _
    $region7: #{tpu_custom_call.1} parent=1 // pred_check_branch
      %22 = sbr.rel (0) target = $region9
    $region8: #{tpu_custom_call.1} parent=1 // pred_region
      %s24 = ssub.s32 384, 384
      %25 = vsyncadd [#allocation3], %s24
      %s27 = sshll.u32 [#allocation6], 4
      %s28 = int_to_ptr.vmem [resolvable:$true] %s27
      %30 = dma.hbm_to_vmem [thread:$0]  %s1, 384, %s28, [#allocation3]
    $region9: #{tpu_custom_call.1} parent=1 // pred_fallthru
      _
    // Predicated region
    $region10: #{tpu_custom_call.1} parent=1 // pred_check
      _
    $region11: #{tpu_custom_call.1} parent=1 // pred_check_branch
      %32 = sbr.rel (0) target = $region13
    $region12: #{tpu_custom_call.1} parent=1 // pred_region
      %s34 = ssub.s32 2048, 2048
      %35 = vsyncadd [#allocation8], %s34
      %s36 = sshll.u32 [#allocation7], 4
      %s37 = int_to_ptr.vmem [resolvable:$true] %s36
      %42 = dma.hbm_to_vmem [thread:$0]  %s2, 2048, %s37, [#allocation8], 128, 128, 8
    $region13: #{tpu_custom_call.1} parent=1 // pred_fallthru
      _
    // Predicated region
    $region14: #{tpu_custom_call.1} parent=1 // pred_check
      _
    $region15: #{tpu_custom_call.1} parent=1 // pred_check_branch
      %44 = sbr.rel (0) target = $region17
    $region16: #{tpu_custom_call.1} parent=1 // pred_region
      _
    $region17: #{tpu_custom_call.1} parent=1 // pred_fallthru
      _
    // Predicated region
    $region18: #{tpu_custom_call.1} parent=1 // pred_check
      _
    $region19: #{tpu_custom_call.1} parent=1 // pred_check_branch
      %46 = sbr.rel (0) target = $region21
    $region20: #{tpu_custom_call.1} parent=1 // pred_region
      %47 = dma.done [#allocation5], 16
    $region21: #{tpu_custom_call.1} parent=1 // pred_fallthru
      _
    // Predicated region
    $region22: #{tpu_custom_call.1} parent=1 // pred_check
      _
    $region23: #{tpu_custom_call.1} parent=1 // pred_check_branch
      %49 = sbr.rel (0) target = $region25
    $region24: #{tpu_custom_call.1} parent=1 // pred_region
      %50 = dma.done [#allocation3], 384
    $region25: #{tpu_custom_call.1} parent=1 // pred_fallthru
      _
    // Predicated region
    $region26: #{tpu_custom_call.1} parent=1 // pred_check
      _
    $region27: #{tpu_custom_call.1} parent=1 // pred_check_branch
      %52 = sbr.rel (0) target = $region29
    $region28: #{tpu_custom_call.1} parent=1 // pred_region
      %53 = dma.done [#allocation8], 2048
    $region29: #{tpu_custom_call.1} parent=1 // pred_fallthru
      _
    %54 = sfence
    %s55 = sld [smem:[#allocation2]]
    %s56 = sld [smem:[#allocation2 + $0x1]]
    %s57 = sld [smem:[#allocation2 + $0x2]]
    %v58 = vld [vmem:[#allocation6] sm:$0xff]
    %v59 = vld [vmem:[#allocation6 + $0x8] sm:$0xff]
    %v60 = vld [vmem:[#allocation6 + $0x10] sm:$0xff]
    %v61 = vld [vmem:[#allocation7] sm:$0xff]
    %v62 = vld [vmem:[#allocation7 + $0x8] sm:$0xff]
    %v63 = vld [vmem:[#allocation7 + $0x10] sm:$0xff]
    %v64 = vld [vmem:[#allocation7 + $0x18] sm:$0xff]
    %v65 = vld [vmem:[#allocation7 + $0x20] sm:$0xff]
    %v66 = vld [vmem:[#allocation7 + $0x28] sm:$0xff]
    %v67 = vld [vmem:[#allocation7 + $0x30] sm:$0xff]
    %v68 = vld [vmem:[#allocation7 + $0x38] sm:$0xff]
    %v69 = vld [vmem:[#allocation7 + $0x40] sm:$0xff]
    %v70 = vld [vmem:[#allocation7 + $0x48] sm:$0xff]
    %v71 = vld [vmem:[#allocation7 + $0x50] sm:$0xff]
    %v72 = vld [vmem:[#allocation7 + $0x58] sm:$0xff]
    %v73 = vld [vmem:[#allocation7 + $0x60] sm:$0xff]
    %v74 = vld [vmem:[#allocation7 + $0x68] sm:$0xff]
    %v75 = vld [vmem:[#allocation7 + $0x70] sm:$0xff]
    %v76 = vld [vmem:[#allocation7 + $0x78] sm:$0xff]
    %v77 = vld [vmem:[%s3] sm:$0x1]
    %v79 = vlaneseq
    %v80 = vshrl.u32 %v79, 7
    %v81 = vsub.s32 0, %v80
    %v82 = vrot.slane %v77, %v81
    %84 = vmatprep.subr.mxu0 0.0
    %85 = vmatpush1.msra.mxu0 %v76
    %86 = vmatprep.subr.mxu0 0.0
    %87 = vmatpush1.msra.mxu0 %v75
    %88 = vmatprep.subr.mxu0 0.0
    %89 = vmatpush1.msra.mxu0 %v74
    %90 = vmatprep.subr.mxu0 0.0
    %91 = vmatpush1.msra.mxu0 %v73
    %92 = vmatprep.subr.mxu0 0.0
    %93 = vmatpush1.msra.mxu0 %v72
    %94 = vmatprep.subr.mxu0 0.0
    %95 = vmatpush1.msra.mxu0 %v71
    %96 = vmatprep.subr.mxu0 0.0
    %97 = vmatpush1.msra.mxu0 %v70
    %98 = vmatprep.subr.mxu0 0.0
    %99 = vmatpush1.msra.mxu0 %v69
    %100 = vmatprep.subr.mxu0 0.0
    %101 = vmatpush1.msra.mxu0 %v68
    %102 = vmatprep.subr.mxu0 0.0
    %103 = vmatpush1.msra.mxu0 %v67
    %104 = vmatprep.subr.mxu0 0.0
    %105 = vmatpush1.msra.mxu0 %v66
    %106 = vmatprep.subr.mxu0 0.0
    %107 = vmatpush1.msra.mxu0 %v65
    %108 = vmatprep.subr.mxu0 0.0
    %109 = vmatpush1.msra.mxu0 %v64
    %110 = vmatprep.subr.mxu0 0.0
    %111 = vmatpush1.msra.mxu0 %v63
    %112 = vmatprep.subr.mxu0 0.0
    %113 = vmatpush1.msra.mxu0 %v62
    %114 = vmatprep.subr.mxu0 0.0
    %115 = vmatpush1.msra.mxu0 %v61
    %116 = vmatprep.subr.mxu0 0.0
    %117 = vmatpush2.msra.mxu0 0.0
    %118 = vmatprep.subr.mxu0 0.0
    %119 = vmatpush2.msra.mxu0 0.0
    %120 = vmatprep.subr.mxu0 0.0
    %121 = vmatpush2.msra.mxu0 0.0
    %122 = vmatprep.subr.mxu0 0.0
    %123 = vmatpush2.msra.mxu0 0.0
    %124 = vmatprep.subr.mxu0 0.0
    %125 = vmatpush2.msra.mxu0 0.0
    %126 = vmatprep.subr.mxu0 0.0
    %127 = vmatpush2.msra.mxu0 0.0
    %128 = vmatprep.subr.mxu0 0.0
    %129 = vmatpush2.msra.mxu0 0.0
    %130 = vmatprep.subr.mxu0 0.0
    %131 = vmatpush2.msra.mxu0 0.0
    %132 = vmatprep.subr.mxu0 0.0
    %133 = vmatpush2.msra.mxu0 0.0
    %134 = vmatprep.subr.mxu0 0.0
    %135 = vmatpush2.msra.mxu0 0.0
    %136 = vmatprep.subr.mxu0 0.0
    %137 = vmatpush2.msra.mxu0 0.0
    %138 = vmatprep.subr.mxu0 0.0
    %139 = vmatpush2.msra.mxu0 0.0
    %140 = vmatprep.subr.mxu0 0.0
    %141 = vmatpush2.msra.mxu0 0.0
    %142 = vmatprep.subr.mxu0 0.0
    %143 = vmatpush2.msra.mxu0 0.0
    %144 = vmatprep.subr.mxu0 0.0
    %145 = vmatpush2.msra.mxu0 0.0
    %146 = vmatprep.subr.mxu0 0.0
    %147 = vmatpush2.msra.mxu0 0.0
    %148 = vmatprep.mubr.f32.mxu0 0.0
    %149 = vmatmul.mubr.f32.gmra.mxu0 %v58
    %v150 = vpop.f32.mrf.mxu0
    %v151 = vadd.f32 %v82, %v150
    %v152 = vpop.f32.mrf.mxu0
    %153 = vdwg.mxu0
    %154 = vst [vmem:[#allocation9] sm:$0xff] %v59
    %v155 = vstv %s55
    %v156 = vmul.f32 %v155, %v58
    %v157 = vsub.f32 %v151, %v156
    %v158 = vstv %s56
    %v159 = vmul.f32 %v158, %v59
    %v160 = vsub.f32 %v157, %v159
    %v161 = vstv %s57
    %v162 = vmul.f32 %v161, %v60
    %v163 = vsub.f32 %v160, %v162
    %164 = vst [vmem:[#allocation9 + $0x8] sm:$0xff] %v163
    %165 = vst [vmem:[#allocation9 + $0x10] sm:$0xff] %v58
    // Predicated region
    $region30: #{tpu_custom_call.1} parent=1 // pred_check
      _
    $region31: #{tpu_custom_call.1} parent=1 // pred_check_branch
      %167 = sbr.rel (0) target = $region33
    $region32: #{tpu_custom_call.1} parent=1 // pred_region
      %s169 = ssub.s32 384, 384
      %170 = vsyncadd [#allocation4], %s169
      %s172 = sshll.u32 [#allocation9], 4
      %s173 = int_to_ptr.vmem [resolvable:$true] %s172
      %175 = dma.vmem_to_hbm [thread:$0]  %s173, 384, %s4, [#allocation4]
    $region33: #{tpu_custom_call.1} parent=1 // pred_fallthru
      _
    // Predicated region
    $region34: #{tpu_custom_call.1} parent=1 // pred_check
      _
    $region35: #{tpu_custom_call.1} parent=1 // pred_check_branch
      %177 = sbr.rel (0) target = $region37
    $region36: #{tpu_custom_call.1} parent=1 // pred_region
      %178 = dma.done [#allocation4], 384
    $region37: #{tpu_custom_call.1} parent=1 // pred_fallthru
      _
    %179 = vsyncpa [#allocation3], 1
    %180 = vsyncpa [#allocation8], 1
    %181 = vsyncpa [#allocation4], 1
    %182 = vsyncpa [#allocation5], 1

// kernel: tpu_custom_call.1
$region0: #{tpu_custom_call.1}
  #allocation0 [shape = 'u32[]', space=smem, size = 0x4, offset = 0x4, fixed_abs, tag = 'smem constant byte address 0x4 - core index']
  #allocation1 [shape = 'u32[144,128]{1,0:T(1,128)}', space=vmem, size = 0x12000, scoped, tag = 'internal scratch']
  %s0 = inlined_call_operand.hbm [shape: f32[3], index: 0, kind: input, shape index: {}]
  %s1 = inlined_call_operand.hbm [shape: f32[8,384], index: 1, kind: input, shape index: {}]
  %s2 = inlined_call_operand.hbm [shape: f32[128,128], index: 2, kind: input, shape index: {}]
  %s3 = inlined_call_operand.vmem [shape: f32[1,128], index: 3, kind: input, shape index: {}]
  %s4 = inlined_call_operand.hbm [shape: f32[8,384], index: 4, kind: output, shape index: {}]
  %s5 = sld [smem:[#allocation0]]
  $region38: #{tpu_custom_call.1} parent=0
    _
  %s7 = ssub.s32 1, %s5
  %s8 = scalar_select 0, %s7, %s5
  $region1: #{tpu_custom_call.1} parent=0
    #allocation2 [shape = 'u8[512]{0}', space=smem, size = 0x200, scoped, tag = 'input window, operand 0, single buffered']
    #allocation3 [shape = 's32[1]{0}', space=sflag, size = 0x4, scoped, tag = 'scoped memory for tpu_custom_call.1']
    #allocation4 [shape = 's32[1]{0}', space=sflag, size = 0x4, scoped, tag = 'scoped memory for tpu_custom_call.1']
    #allocation5 [shape = 's32[1]{0}', space=sflag, size = 0x4, scoped, tag = 'scoped memory for tpu_custom_call.1']
    #allocation6 [shape = 'u8[12288]{0}', space=vmem, size = 0x3000, scoped, tag = 'input window, operand 1, single buffered']
    #allocation7 [shape = 'u8[65536]{0}', space=vmem, size = 0x10000, scoped, tag = 'input window, operand 2, single buffered']
    #allocation8 [shape = 's32[1]{0}', space=sflag, size = 0x4, scoped, tag = 'scoped memory for tpu_custom_call.1']
    #allocation9 [shape = 'u8[12288]{0}', space=vmem, size = 0x3000, scoped, tag = 'output window, operand 0, single buffered']
    %9 = vsyncpa [#allocation5], 0
    %10 = vsyncpa [#allocation3], 0
    %11 = vsyncpa [#allocation8], 0
    %12 = vsyncpa [#allocation4], 0
    // Predicated region
    $region2: #{tpu_custom_call.1} parent=1 // pred_check
      _
    $region3: #{tpu_custom_call.1} parent=1 // pred_check_branch
      %14 = sbr.rel (0) target = $region5
    $region4: #{tpu_custom_call.1} parent=1 // pred_region
      %s16 = ssub.s32 16, 16
      %17 = vsyncadd [#allocation5], %s16
      %20 = dma.hbm_to_smem %s0, 16, [#allocation2], [#allocation5]
    $region5: #{tpu_custom_call.1} parent=1 // pred_fallthru
      _
    // Predicated region
    $region6: #{tpu_custom_call.1} parent=1 // pred_check
      _
    $region7: #{tpu_custom_call.1} parent=1 // pred_check_branch
      %22 = sbr.rel (0) target = $region9
    $region8: #{tpu_custom_call.1} parent=1 // pred_region
      %s24 = ssub.s32 384, 384
      %25 = vsyncadd [#allocation3], %s24
      %s27 = sshll.u32 [#allocation6], 4
      %s28 = int_to_ptr.vmem [resolvable:$true] %s27
      %30 = dma.hbm_to_vmem [thread:$0]  %s1, 384, %s28, [#allocation3]
    $region9: #{tpu_custom_call.1} parent=1 // pred_fallthru
      _
    // Predicated region
    $region10: #{tpu_custom_call.1} parent=1 // pred_check
      _
    $region11: #{tpu_custom_call.1} parent=1 // pred_check_branch
      %32 = sbr.rel (0) target = $region13
    $region12: #{tpu_custom_call.1} parent=1 // pred_region
      %s34 = ssub.s32 2048, 2048
      %35 = vsyncadd [#allocation8], %s34
      %s36 = sshll.u32 [#allocation7], 4
      %s37 = int_to_ptr.vmem [resolvable:$true] %s36
      %42 = dma.hbm_to_vmem [thread:$0]  %s2, 2048, %s37, [#allocation8], 128, 128, 8
    $region13: #{tpu_custom_call.1} parent=1 // pred_fallthru
      _
    // Predicated region
    $region14: #{tpu_custom_call.1} parent=1 // pred_check
      _
    $region15: #{tpu_custom_call.1} parent=1 // pred_check_branch
      %44 = sbr.rel (0) target = $region17
    $region16: #{tpu_custom_call.1} parent=1 // pred_region
      _
    $region17: #{tpu_custom_call.1} parent=1 // pred_fallthru
      _
    // Predicated region
    $region18: #{tpu_custom_call.1} parent=1 // pred_check
      _
    $region19: #{tpu_custom_call.1} parent=1 // pred_check_branch
      %46 = sbr.rel (0) target = $region21
    $region20: #{tpu_custom_call.1} parent=1 // pred_region
      %47 = dma.done [#allocation5], 16
    $region21: #{tpu_custom_call.1} parent=1 // pred_fallthru
      _
    // Predicated region
    $region22: #{tpu_custom_call.1} parent=1 // pred_check
      _
    $region23: #{tpu_custom_call.1} parent=1 // pred_check_branch
      %49 = sbr.rel (0) target = $region25
    $region24: #{tpu_custom_call.1} parent=1 // pred_region
      %50 = dma.done [#allocation3], 384
    $region25: #{tpu_custom_call.1} parent=1 // pred_fallthru
      _
    // Predicated region
    $region26: #{tpu_custom_call.1} parent=1 // pred_check
      _
    $region27: #{tpu_custom_call.1} parent=1 // pred_check_branch
      %52 = sbr.rel (0) target = $region29
    $region28: #{tpu_custom_call.1} parent=1 // pred_region
      %53 = dma.done [#allocation8], 2048
    $region29: #{tpu_custom_call.1} parent=1 // pred_fallthru
      _
    %54 = sfence
    %s55 = sld [smem:[#allocation2]]
    %s56 = sld [smem:[#allocation2 + $0x1]]
    %s57 = sld [smem:[#allocation2 + $0x2]]
    %v58 = vld [vmem:[#allocation6] sm:$0xff]
    %v59 = vld [vmem:[#allocation6 + $0x8] sm:$0xff]
    %v60 = vld [vmem:[#allocation6 + $0x10] sm:$0xff]
    %v61 = vld [vmem:[#allocation7] sm:$0xff]
    %v62 = vld [vmem:[#allocation7 + $0x8] sm:$0xff]
    %v63 = vld [vmem:[#allocation7 + $0x10] sm:$0xff]
    %v64 = vld [vmem:[#allocation7 + $0x18] sm:$0xff]
    %v65 = vld [vmem:[#allocation7 + $0x20] sm:$0xff]
    %v66 = vld [vmem:[#allocation7 + $0x28] sm:$0xff]
    %v67 = vld [vmem:[#allocation7 + $0x30] sm:$0xff]
    %v68 = vld [vmem:[#allocation7 + $0x38] sm:$0xff]
    %v69 = vld [vmem:[#allocation7 + $0x40] sm:$0xff]
    %v70 = vld [vmem:[#allocation7 + $0x48] sm:$0xff]
    %v71 = vld [vmem:[#allocation7 + $0x50] sm:$0xff]
    %v72 = vld [vmem:[#allocation7 + $0x58] sm:$0xff]
    %v73 = vld [vmem:[#allocation7 + $0x60] sm:$0xff]
    %v74 = vld [vmem:[#allocation7 + $0x68] sm:$0xff]
    %v75 = vld [vmem:[#allocation7 + $0x70] sm:$0xff]
    %v76 = vld [vmem:[#allocation7 + $0x78] sm:$0xff]
    %v77 = vld [vmem:[%s3] sm:$0x1]
    %v79 = vlaneseq
    %v80 = vshrl.u32 %v79, 7
    %v81 = vsub.s32 0, %v80
    %v82 = vrot.slane %v77, %v81
    %84 = vmatprep.subr.mxu0 0.0
    %85 = vmatpush1.msra.mxu0 %v76
    %86 = vmatprep.subr.mxu0 0.0
    %87 = vmatpush1.msra.mxu0 %v75
    %88 = vmatprep.subr.mxu0 0.0
    %89 = vmatpush1.msra.mxu0 %v74
    %90 = vmatprep.subr.mxu0 0.0
    %91 = vmatpush1.msra.mxu0 %v73
    %92 = vmatprep.subr.mxu0 0.0
    %93 = vmatpush1.msra.mxu0 %v72
    %94 = vmatprep.subr.mxu0 0.0
    %95 = vmatpush1.msra.mxu0 %v71
    %96 = vmatprep.subr.mxu0 0.0
    %97 = vmatpush1.msra.mxu0 %v70
    %98 = vmatprep.subr.mxu0 0.0
    %99 = vmatpush1.msra.mxu0 %v69
    %100 = vmatprep.subr.mxu0 0.0
    %101 = vmatpush1.msra.mxu0 %v68
    %102 = vmatprep.subr.mxu0 0.0
    %103 = vmatpush1.msra.mxu0 %v67
    %104 = vmatprep.subr.mxu0 0.0
    %105 = vmatpush1.msra.mxu0 %v66
    %106 = vmatprep.subr.mxu0 0.0
    %107 = vmatpush1.msra.mxu0 %v65
    %108 = vmatprep.subr.mxu0 0.0
    %109 = vmatpush1.msra.mxu0 %v64
    %110 = vmatprep.subr.mxu0 0.0
    %111 = vmatpush1.msra.mxu0 %v63
    %112 = vmatprep.subr.mxu0 0.0
    %113 = vmatpush1.msra.mxu0 %v62
    %114 = vmatprep.subr.mxu0 0.0
    %115 = vmatpush1.msra.mxu0 %v61
    %116 = vmatprep.subr.mxu0 0.0
    %117 = vmatpush2.msra.mxu0 0.0
    %118 = vmatprep.subr.mxu0 0.0
    %119 = vmatpush2.msra.mxu0 0.0
    %120 = vmatprep.subr.mxu0 0.0
    %121 = vmatpush2.msra.mxu0 0.0
    %122 = vmatprep.subr.mxu0 0.0
    %123 = vmatpush2.msra.mxu0 0.0
    %124 = vmatprep.subr.mxu0 0.0
    %125 = vmatpush2.msra.mxu0 0.0
    %126 = vmatprep.subr.mxu0 0.0
    %127 = vmatpush2.msra.mxu0 0.0
    %128 = vmatprep.subr.mxu0 0.0
    %129 = vmatpush2.msra.mxu0 0.0
    %130 = vmatprep.subr.mxu0 0.0
    %131 = vmatpush2.msra.mxu0 0.0
    %132 = vmatprep.subr.mxu0 0.0
    %133 = vmatpush2.msra.mxu0 0.0
    %134 = vmatprep.subr.mxu0 0.0
    %135 = vmatpush2.msra.mxu0 0.0
    %136 = vmatprep.subr.mxu0 0.0
    %137 = vmatpush2.msra.mxu0 0.0
    %138 = vmatprep.subr.mxu0 0.0
    %139 = vmatpush2.msra.mxu0 0.0
    %140 = vmatprep.subr.mxu0 0.0
    %141 = vmatpush2.msra.mxu0 0.0
    %142 = vmatprep.subr.mxu0 0.0
    %143 = vmatpush2.msra.mxu0 0.0
    %144 = vmatprep.subr.mxu0 0.0
    %145 = vmatpush2.msra.mxu0 0.0
    %146 = vmatprep.subr.mxu0 0.0
    %147 = vmatpush2.msra.mxu0 0.0
    %148 = vmatprep.mubr.f32.mxu0 0.0
    %149 = vmatmul.mubr.f32.gmra.mxu0 %v58
    %v150 = vpop.f32.mrf.mxu0
    %v151 = vadd.f32 %v82, %v150
    %v152 = vpop.f32.mrf.mxu0
    %153 = vdwg.mxu0
    %154 = vst [vmem:[#allocation9] sm:$0xff] %v59
    %v155 = vstv %s55
    %v156 = vmul.f32 %v155, %v58
    %v157 = vsub.f32 %v151, %v156
    %v158 = vstv %s56
    %v159 = vmul.f32 %v158, %v59
    %v160 = vsub.f32 %v157, %v159
    %v161 = vstv %s57
    %v162 = vmul.f32 %v161, %v60
    %v163 = vsub.f32 %v160, %v162
    %164 = vst [vmem:[#allocation9 + $0x8] sm:$0xff] %v163
    %165 = vst [vmem:[#allocation9 + $0x10] sm:$0xff] %v58
    // Predicated region
    $region30: #{tpu_custom_call.1} parent=1 // pred_check
      _
    $region31: #{tpu_custom_call.1} parent=1 // pred_check_branch
      %167 = sbr.rel (0) target = $region33
    $region32: #{tpu_custom_call.1} parent=1 // pred_region
      %s169 = ssub.s32 384, 384
      %170 = vsyncadd [#allocation4], %s169
      %s172 = sshll.u32 [#allocation9], 4
      %s173 = int_to_ptr.vmem [resolvable:$true] %s172
      %175 = dma.vmem_to_hbm [thread:$0]  %s173, 384, %s4, [#allocation4]
    $region33: #{tpu_custom_call.1} parent=1 // pred_fallthru
      _
    // Predicated region
    $region34: #{tpu_custom_call.1} parent=1 // pred_check
      _
    $region35: #{tpu_custom_call.1} parent=1 // pred_check_branch
      %177 = sbr.rel (0) target = $region37
    $region36: #{tpu_custom_call.1} parent=1 // pred_region
      %178 = dma.done [#allocation4], 384
    $region37: #{tpu_custom_call.1} parent=1 // pred_fallthru
      _
    %179 = vsyncpa [#allocation3], 1
    %180 = vsyncpa [#allocation8], 1
    %181 = vsyncpa [#allocation4], 1
    %182 = vsyncpa [#allocation5], 1

</llo_original>
